<compile_context>
chip_gen: v7x
topology: tpu7x:2x2x1
jax: 0.10.0
libtpu: 0.0.40
codegen_flags: <defaults>
</compile_context>

<pallas_src>
import jax
import jax.numpy as jnp
from jax.experimental import pallas as pl
from jax.experimental.pallas import tpu as pltpu

_LANES = 128
_SUBLANES = 8


def _lda_kernel(w_ref, b_ref, x_ref, o_ref):
    """out[nb, o, r, l] = bias[o] + sum_k w[o, k] * x[nb, k, r, l].

    w_ref: (C_out, C_in) f32 in SMEM (scalar reads)
    b_ref: (C_out,)      f32 in SMEM
    x_ref: (NB, C_in,  tR, 128) VMEM input tile (lane/sublane dense)
    o_ref: (NB, C_out, tR, 128) VMEM output tile (lane/sublane dense)
    """
    c_in = x_ref.shape[1]
    c_out = o_ref.shape[1]
    # TODO(synk): for min(C_in, C_out) > ~16 switch to an MXU dot path; this
    # LDA head is 4-in / 3-out, where the unrolled scalar*slab VPU loop wins.
    for o in range(c_out):
        # Bias folded into the first FMA term; scalar (SMEM) * full (tR,128) slabs.
        acc = b_ref[o] + w_ref[o, 0] * x_ref[:, 0]
        for k in range(1, c_in):
            acc = acc + w_ref[o, k] * x_ref[:, k]
        o_ref[:, o] = acc.astype(o_ref.dtype)


def _choose_tiling(n, rows, c_in, c_out, target_tile_bytes):
    """Pick (batch_block, row_block) so each grid step moves ~target bytes."""
    bytes_per_row = (c_in + c_out) * _LANES * 4          # in + out, f32
    rows_target = max(_SUBLANES, target_tile_bytes // bytes_per_row)
    if rows > rows_target:
        # Spatial axis alone is big enough: tile it, one batch element per step.
        t_rows = max(_SUBLANES, (rows_target // _SUBLANES) * _SUBLANES)
        nb = 1
    else:
        # Small spatial extent: take the whole spatial axis and block batch.
        t_rows = rows
        nb = max(1, min(n, int(rows_target // max(rows, 1))))
    # v7x megacore: keep >= 2 grid steps along a parallel axis when possible.
    if pl.cdiv(n, nb) * pl.cdiv(rows, t_rows) < 2:
        if nb > 1:
            nb = max(1, (n + 1) // 2)
        elif rows >= 2 * _SUBLANES:
            half = ((rows + 1) // 2 + _SUBLANES - 1) // _SUBLANES * _SUBLANES
            if 0 < half < rows:
                t_rows = half
    return nb, t_rows


def lda_forward(features_nchw, scalings, xbar, *, target_tile_bytes=4 << 20):
    """Equivalent of LDA_Layer.forward (F.conv2d with a 1x1 kernel).

    features_nchw: (N, C_in, H, W) float32
    scalings:      (C_in, C_out)   float32
    xbar:          (C_in,)         float32
    returns:       (N, C_out, H, W) float32
    """
    N, C_in, H, W = features_nchw.shape
    C_out = scalings.shape[1]
    S = H * W

    # Parameter setup (plain JAX glue):
    #   conv weight (C_out, C_in, 1, 1) == scalings^T  -> (C_out, C_in) matrix
    #   bias = -(scalings^T @ xbar)                    -> (C_out,)
    w_t = scalings.T.astype(jnp.float32)
    bias = -(w_t @ xbar.astype(jnp.float32))

    # NCHW -> (N, C_in, S) (free row-major reshape), pad S up to a 128-multiple
    # so every tile is lane-dense, then fold spatial into (rows, 128) so both
    # sublanes and lanes are fully occupied.
    S_pad = pl.cdiv(S, _LANES) * _LANES
    x = features_nchw.reshape(N, C_in, S).astype(jnp.float32)
    if S_pad != S:
        x = jnp.pad(x, ((0, 0), (0, 0), (0, S_pad - S)))
    R = S_pad // _LANES
    x = x.reshape(N, C_in, R, _LANES)

    NB, tR = _choose_tiling(N, R, C_in, C_out, target_tile_bytes)
    grid = (pl.cdiv(N, NB), pl.cdiv(R, tR))

    # VMEM budget: double-buffered input+output tiles plus headroom, capped
    # safely below v7x's 64 MiB physical VMEM (fits v5e/v6e trivially).
    tile_bytes = NB * (C_in + C_out) * tR * _LANES * 4
    vmem_limit = int(min(48 << 20, max(16 << 20, 3 * tile_bytes + (2 << 20))))

    out = pl.pallas_call(
        _lda_kernel,
        out_shape=jax.ShapeDtypeStruct((N, C_out, R, _LANES), jnp.float32),
        grid_spec=pltpu.PrefetchScalarGridSpec(
            num_scalar_prefetch=0,
            grid=grid,
            in_specs=[
                # Weight/bias scalars live in SMEM -> scalar*slab FMAs, no
                # XLU broadcast traffic, no tiny VMEM vreg tiles.
                pl.BlockSpec(memory_space=pltpu.MemorySpace.SMEM),
                pl.BlockSpec(memory_space=pltpu.MemorySpace.SMEM),
                pl.BlockSpec((NB, C_in, tR, _LANES), lambda b, r: (b, 0, r, 0)),
            ],
            out_specs=pl.BlockSpec((NB, C_out, tR, _LANES),
                                   lambda b, r: (b, 0, r, 0)),
        ),
        compiler_params=pltpu.CompilerParams(
            # Both axes independent -> shard across the 2 TCs on v7x.
            dimension_semantics=("parallel", "parallel"),
            vmem_limit_bytes=vmem_limit),
    )(w_t, bias, x)

    # (N, C_out, rows*128) -> strip spatial padding -> NCHW.  Free reshapes.
    out = out.reshape(N, C_out, S_pad)
    if S_pad != S:
        out = out[:, :, :S]
    return out.reshape(N, C_out, H, W)


def lda_reference(features_nchw, scalings, xbar):
    """Pure-JAX reference of the PyTorch 1x1 conv."""
    w = scalings.T                                   # (C_out, C_in)
    b = -(scalings.T @ xbar)                         # (C_out,)
    out = jnp.einsum("nchw,oc->nohw", features_nchw, w,
                     precision=jax.lax.Precision.HIGHEST)
    return out + b[None, :, None, None]


if __name__ == "__main__":
    key = jax.random.PRNGKey(0)
    k1, k2, k3, k4 = jax.random.split(key, 4)

    N, C_in, H, W = 2, 4, 16, 16
    C_out = 3

    features = jax.random.normal(k1, (N, C_in, H, W), dtype=jnp.float32)
    scalings = jax.random.normal(k2, (C_in, C_out), dtype=jnp.float32)
    xbar = jax.random.normal(k3, (C_in,), dtype=jnp.float32)

    out = jax.block_until_ready(lda_forward(features, scalings, xbar))
    ref = lda_reference(features, scalings, xbar)
    assert out.shape == (N, C_out, H, W)
    assert jnp.allclose(out, ref, atol=1e-4, rtol=1e-4)

    # Odd spatial size (19x19 -> S=361, not a 128-multiple): exercises the
    # lane-padding path while keeping all kernel stores lane-dense.
    features2 = jax.random.normal(k4, (1, C_in, 19, 19), dtype=jnp.float32)
    out2 = jax.block_until_ready(lda_forward(features2, scalings, xbar))
    ref2 = lda_reference(features2, scalings, xbar)
    assert jnp.allclose(out2, ref2, atol=1e-4, rtol=1e-4)

    print("KERNEL_OK")
</pallas_src>

<mosaic_0001>
module attributes {stable_mosaic.version = 11 : i64} {
  func.func @_lda_kernel(%arg0: i32, %arg1: i32, %arg2: memref<3x4xf32, #tpu.memory_space<smem>>, %arg3: memref<3xf32, #tpu.memory_space<smem>>, %arg4: memref<1x4x2x128xf32, #tpu.memory_space<vmem>>, %arg5: memref<1x3x2x128xf32, #tpu.memory_space<vmem>>) attributes {dimension_semantics = [#tpu.dimension_semantics<parallel>, #tpu.dimension_semantics<parallel>], iteration_bounds = array<i64: 2, 1>, scalar_prefetch = 0 : i64, scratch_operands = 0 : i64, tpu.core_type = #tpu.core_type<tc>, window_params = [{transform_indices = @transform_0, window_bounds = array<i64: 3, 4>}, {transform_indices = @transform_1, window_bounds = array<i64: 3>}, {transform_indices = @transform_2, window_bounds = array<i64: 1, 4, 2, 128>}, {transform_indices = @transform_3, window_bounds = array<i64: 1, 3, 2, 128>}]} {
    %c0 = arith.constant 0 : index
    %0 = memref.load %arg3[%c0] : memref<3xf32, #tpu.memory_space<smem>>
    %c0_0 = arith.constant 0 : index
    %c0_1 = arith.constant 0 : index
    %1 = memref.load %arg2[%c0_0, %c0_1] : memref<3x4xf32, #tpu.memory_space<smem>>
    %c0_2 = arith.constant 0 : index
    %c0_3 = arith.constant 0 : index
    %c0_4 = arith.constant 0 : index
    %c0_5 = arith.constant 0 : index
    %2 = vector.load %arg4[%c0_2, %c0_3, %c0_4, %c0_5] : memref<1x4x2x128xf32, #tpu.memory_space<vmem>>, vector<1x1x2x128xf32>
    %3 = vector.shape_cast %2 : vector<1x1x2x128xf32> to vector<1x2x128xf32>
    %4 = vector.broadcast %1 : f32 to vector<1x2x128xf32>
    %5 = arith.mulf %4, %3 : vector<1x2x128xf32>
    %6 = vector.broadcast %0 : f32 to vector<1x2x128xf32>
    %7 = arith.addf %6, %5 : vector<1x2x128xf32>
    %c0_6 = arith.constant 0 : index
    %c1 = arith.constant 1 : index
    %8 = memref.load %arg2[%c0_6, %c1] : memref<3x4xf32, #tpu.memory_space<smem>>
    %c0_7 = arith.constant 0 : index
    %c1_8 = arith.constant 1 : index
    %c0_9 = arith.constant 0 : index
    %c0_10 = arith.constant 0 : index
    %9 = vector.load %arg4[%c0_7, %c1_8, %c0_9, %c0_10] : memref<1x4x2x128xf32, #tpu.memory_space<vmem>>, vector<1x1x2x128xf32>
    %10 = vector.shape_cast %9 : vector<1x1x2x128xf32> to vector<1x2x128xf32>
    %11 = vector.broadcast %8 : f32 to vector<1x2x128xf32>
    %12 = arith.mulf %11, %10 : vector<1x2x128xf32>
    %13 = arith.addf %7, %12 : vector<1x2x128xf32>
    %c0_11 = arith.constant 0 : index
    %c2 = arith.constant 2 : index
    %14 = memref.load %arg2[%c0_11, %c2] : memref<3x4xf32, #tpu.memory_space<smem>>
    %c0_12 = arith.constant 0 : index
    %c2_13 = arith.constant 2 : index
    %c0_14 = arith.constant 0 : index
    %c0_15 = arith.constant 0 : index
    %15 = vector.load %arg4[%c0_12, %c2_13, %c0_14, %c0_15] : memref<1x4x2x128xf32, #tpu.memory_space<vmem>>, vector<1x1x2x128xf32>
    %16 = vector.shape_cast %15 : vector<1x1x2x128xf32> to vector<1x2x128xf32>
    %17 = vector.broadcast %14 : f32 to vector<1x2x128xf32>
    %18 = arith.mulf %17, %16 : vector<1x2x128xf32>
    %19 = arith.addf %13, %18 : vector<1x2x128xf32>
    %c0_16 = arith.constant 0 : index
    %c3 = arith.constant 3 : index
    %20 = memref.load %arg2[%c0_16, %c3] : memref<3x4xf32, #tpu.memory_space<smem>>
    %c0_17 = arith.constant 0 : index
    %c3_18 = arith.constant 3 : index
    %c0_19 = arith.constant 0 : index
    %c0_20 = arith.constant 0 : index
    %21 = vector.load %arg4[%c0_17, %c3_18, %c0_19, %c0_20] : memref<1x4x2x128xf32, #tpu.memory_space<vmem>>, vector<1x1x2x128xf32>
    %22 = vector.shape_cast %21 : vector<1x1x2x128xf32> to vector<1x2x128xf32>
    %23 = vector.broadcast %20 : f32 to vector<1x2x128xf32>
    %24 = arith.mulf %23, %22 : vector<1x2x128xf32>
    %25 = arith.addf %19, %24 : vector<1x2x128xf32>
    %c0_21 = arith.constant 0 : index
    %c0_22 = arith.constant 0 : index
    %c0_23 = arith.constant 0 : index
    %c0_24 = arith.constant 0 : index
    %26 = vector.load %arg5[%c0_21, %c0_22, %c0_23, %c0_24] : memref<1x3x2x128xf32, #tpu.memory_space<vmem>>, vector<1x1x2x128xf32>
    %27 = vector.shape_cast %26 : vector<1x1x2x128xf32> to vector<1x2x128xf32>
    %28 = vector.shape_cast %25 : vector<1x2x128xf32> to vector<1x1x2x128xf32>
    tpu.vector_store %arg5[%c0_21, %c0_22, %c0_23, %c0_24], %28 {strides = array<i32>} : memref<1x3x2x128xf32, #tpu.memory_space<vmem>>, vector<1x1x2x128xf32>,
    %c1_25 = arith.constant 1 : index
    %29 = memref.load %arg3[%c1_25] : memref<3xf32, #tpu.memory_space<smem>>
    %c1_26 = arith.constant 1 : index
    %c0_27 = arith.constant 0 : index
    %30 = memref.load %arg2[%c1_26, %c0_27] : memref<3x4xf32, #tpu.memory_space<smem>>
    %c0_28 = arith.constant 0 : index
    %c0_29 = arith.constant 0 : index
    %c0_30 = arith.constant 0 : index
    %c0_31 = arith.constant 0 : index
    %31 = vector.load %arg4[%c0_28, %c0_29, %c0_30, %c0_31] : memref<1x4x2x128xf32, #tpu.memory_space<vmem>>, vector<1x1x2x128xf32>
    %32 = vector.shape_cast %31 : vector<1x1x2x128xf32> to vector<1x2x128xf32>
    %33 = vector.broadcast %30 : f32 to vector<1x2x128xf32>
    %34 = arith.mulf %33, %32 : vector<1x2x128xf32>
    %35 = vector.broadcast %29 : f32 to vector<1x2x128xf32>
    %36 = arith.addf %35, %34 : vector<1x2x128xf32>
    %c1_32 = arith.constant 1 : index
    %c1_33 = arith.constant 1 : index
    %37 = memref.load %arg2[%c1_32, %c1_33] : memref<3x4xf32, #tpu.memory_space<smem>>
    %c0_34 = arith.constant 0 : index
    %c1_35 = arith.constant 1 : index
    %c0_36 = arith.constant 0 : index
    %c0_37 = arith.constant 0 : index
    %38 = vector.load %arg4[%c0_34, %c1_35, %c0_36, %c0_37] : memref<1x4x2x128xf32, #tpu.memory_space<vmem>>, vector<1x1x2x128xf32>
    %39 = vector.shape_cast %38 : vector<1x1x2x128xf32> to vector<1x2x128xf32>
    %40 = vector.broadcast %37 : f32 to vector<1x2x128xf32>
    %41 = arith.mulf %40, %39 : vector<1x2x128xf32>
    %42 = arith.addf %36, %41 : vector<1x2x128xf32>
    %c1_38 = arith.constant 1 : index
    %c2_39 = arith.constant 2 : index
    %43 = memref.load %arg2[%c1_38, %c2_39] : memref<3x4xf32, #tpu.memory_space<smem>>
    %c0_40 = arith.constant 0 : index
    %c2_41 = arith.constant 2 : index
    %c0_42 = arith.constant 0 : index
    %c0_43 = arith.constant 0 : index
    %44 = vector.load %arg4[%c0_40, %c2_41, %c0_42, %c0_43] : memref<1x4x2x128xf32, #tpu.memory_space<vmem>>, vector<1x1x2x128xf32>
    %45 = vector.shape_cast %44 : vector<1x1x2x128xf32> to vector<1x2x128xf32>
    %46 = vector.broadcast %43 : f32 to vector<1x2x128xf32>
    %47 = arith.mulf %46, %45 : vector<1x2x128xf32>
    %48 = arith.addf %42, %47 : vector<1x2x128xf32>
    %c1_44 = arith.constant 1 : index
    %c3_45 = arith.constant 3 : index
    %49 = memref.load %arg2[%c1_44, %c3_45] : memref<3x4xf32, #tpu.memory_space<smem>>
    %c0_46 = arith.constant 0 : index
    %c3_47 = arith.constant 3 : index
    %c0_48 = arith.constant 0 : index
    %c0_49 = arith.constant 0 : index
    %50 = vector.load %arg4[%c0_46, %c3_47, %c0_48, %c0_49] : memref<1x4x2x128xf32, #tpu.memory_space<vmem>>, vector<1x1x2x128xf32>
    %51 = vector.shape_cast %50 : vector<1x1x2x128xf32> to vector<1x2x128xf32>
    %52 = vector.broadcast %49 : f32 to vector<1x2x128xf32>
    %53 = arith.mulf %52, %51 : vector<1x2x128xf32>
    %54 = arith.addf %48, %53 : vector<1x2x128xf32>
    %c0_50 = arith.constant 0 : index
    %c1_51 = arith.constant 1 : index
    %c0_52 = arith.constant 0 : index
    %c0_53 = arith.constant 0 : index
    %55 = vector.load %arg5[%c0_50, %c1_51, %c0_52, %c0_53] : memref<1x3x2x128xf32, #tpu.memory_space<vmem>>, vector<1x1x2x128xf32>
    %56 = vector.shape_cast %55 : vector<1x1x2x128xf32> to vector<1x2x128xf32>
    %57 = vector.shape_cast %54 : vector<1x2x128xf32> to vector<1x1x2x128xf32>
    tpu.vector_store %arg5[%c0_50, %c1_51, %c0_52, %c0_53], %57 {strides = array<i32>} : memref<1x3x2x128xf32, #tpu.memory_space<vmem>>, vector<1x1x2x128xf32>,
    %c2_54 = arith.constant 2 : index
    %58 = memref.load %arg3[%c2_54] : memref<3xf32, #tpu.memory_space<smem>>
    %c2_55 = arith.constant 2 : index
    %c0_56 = arith.constant 0 : index
    %59 = memref.load %arg2[%c2_55, %c0_56] : memref<3x4xf32, #tpu.memory_space<smem>>
    %c0_57 = arith.constant 0 : index
    %c0_58 = arith.constant 0 : index
    %c0_59 = arith.constant 0 : index
    %c0_60 = arith.constant 0 : index
    %60 = vector.load %arg4[%c0_57, %c0_58, %c0_59, %c0_60] : memref<1x4x2x128xf32, #tpu.memory_space<vmem>>, vector<1x1x2x128xf32>
    %61 = vector.shape_cast %60 : vector<1x1x2x128xf32> to vector<1x2x128xf32>
    %62 = vector.broadcast %59 : f32 to vector<1x2x128xf32>
    %63 = arith.mulf %62, %61 : vector<1x2x128xf32>
    %64 = vector.broadcast %58 : f32 to vector<1x2x128xf32>
    %65 = arith.addf %64, %63 : vector<1x2x128xf32>
    %c2_61 = arith.constant 2 : index
    %c1_62 = arith.constant 1 : index
    %66 = memref.load %arg2[%c2_61, %c1_62] : memref<3x4xf32, #tpu.memory_space<smem>>
    %c0_63 = arith.constant 0 : index
    %c1_64 = arith.constant 1 : index
    %c0_65 = arith.constant 0 : index
    %c0_66 = arith.constant 0 : index
    %67 = vector.load %arg4[%c0_63, %c1_64, %c0_65, %c0_66] : memref<1x4x2x128xf32, #tpu.memory_space<vmem>>, vector<1x1x2x128xf32>
    %68 = vector.shape_cast %67 : vector<1x1x2x128xf32> to vector<1x2x128xf32>
    %69 = vector.broadcast %66 : f32 to vector<1x2x128xf32>
    %70 = arith.mulf %69, %68 : vector<1x2x128xf32>
    %71 = arith.addf %65, %70 : vector<1x2x128xf32>
    %c2_67 = arith.constant 2 : index
    %c2_68 = arith.constant 2 : index
    %72 = memref.load %arg2[%c2_67, %c2_68] : memref<3x4xf32, #tpu.memory_space<smem>>
    %c0_69 = arith.constant 0 : index
    %c2_70 = arith.constant 2 : index
    %c0_71 = arith.constant 0 : index
    %c0_72 = arith.constant 0 : index
    %73 = vector.load %arg4[%c0_69, %c2_70, %c0_71, %c0_72] : memref<1x4x2x128xf32, #tpu.memory_space<vmem>>, vector<1x1x2x128xf32>
    %74 = vector.shape_cast %73 : vector<1x1x2x128xf32> to vector<1x2x128xf32>
    %75 = vector.broadcast %72 : f32 to vector<1x2x128xf32>
    %76 = arith.mulf %75, %74 : vector<1x2x128xf32>
    %77 = arith.addf %71, %76 : vector<1x2x128xf32>
    %c2_73 = arith.constant 2 : index
    %c3_74 = arith.constant 3 : index
    %78 = memref.load %arg2[%c2_73, %c3_74] : memref<3x4xf32, #tpu.memory_space<smem>>
    %c0_75 = arith.constant 0 : index
    %c3_76 = arith.constant 3 : index
    %c0_77 = arith.constant 0 : index
    %c0_78 = arith.constant 0 : index
    %79 = vector.load %arg4[%c0_75, %c3_76, %c0_77, %c0_78] : memref<1x4x2x128xf32, #tpu.memory_space<vmem>>, vector<1x1x2x128xf32>
    %80 = vector.shape_cast %79 : vector<1x1x2x128xf32> to vector<1x2x128xf32>
    %81 = vector.broadcast %78 : f32 to vector<1x2x128xf32>
    %82 = arith.mulf %81, %80 : vector<1x2x128xf32>
    %83 = arith.addf %77, %82 : vector<1x2x128xf32>
    %c0_79 = arith.constant 0 : index
    %c2_80 = arith.constant 2 : index
    %c0_81 = arith.constant 0 : index
    %c0_82 = arith.constant 0 : index
    %84 = vector.load %arg5[%c0_79, %c2_80, %c0_81, %c0_82] : memref<1x3x2x128xf32, #tpu.memory_space<vmem>>, vector<1x1x2x128xf32>
    %85 = vector.shape_cast %84 : vector<1x1x2x128xf32> to vector<1x2x128xf32>
    %86 = vector.shape_cast %83 : vector<1x2x128xf32> to vector<1x1x2x128xf32>
    tpu.vector_store %arg5[%c0_79, %c2_80, %c0_81, %c0_82], %86 {strides = array<i32>} : memref<1x3x2x128xf32, #tpu.memory_space<vmem>>, vector<1x1x2x128xf32>,
    return
  }
  func.func @transform_0(%arg0: i32, %arg1: i32) -> (i32, i32) {
    %c0_i32 = arith.constant 0 : i32
    %c0_i32_0 = arith.constant 0 : i32
    %c0_i32_1 = arith.constant 0 : i32
    return %c0_i32, %c0_i32_0 : i32, i32
  }
  func.func @transform_1(%arg0: i32, %arg1: i32) -> i32 {
    %c0_i32 = arith.constant 0 : i32
    %c0_i32_0 = arith.constant 0 : i32
    return %c0_i32 : i32
  }
  func.func @transform_2(%arg0: i32, %arg1: i32) -> (i32, i32, i32, i32) {
    %c0_i32 = arith.constant 0 : i32
    %c0_i32_0 = arith.constant 0 : i32
    %c0_i32_1 = arith.constant 0 : i32
    return %arg0, %c0_i32, %arg1, %c0_i32_0 : i32, i32, i32, i32
  }
  func.func @transform_3(%arg0: i32, %arg1: i32) -> (i32, i32, i32, i32) {
    %c0_i32 = arith.constant 0 : i32
    %c0_i32_0 = arith.constant 0 : i32
    %c0_i32_1 = arith.constant 0 : i32
    return %arg0, %c0_i32, %arg1, %c0_i32_0 : i32, i32, i32, i32
  }
}

</mosaic_0001>

<llo_original>
// kernel: tpu_custom_call.1
$region0: #{tpu_custom_call.1}
  #allocation0 [shape = 'u32[]', space=smem, size = 0x4, offset = 0x4, fixed_abs, tag = 'smem constant byte address 0x4 - core index']
  #allocation1 [shape = 'u32[144,128]{1,0:T(1,128)}', space=vmem, size = 0x12000, scoped, tag = 'internal scratch']
  %s0 = inlined_call_operand.hbm [shape: f32[3,4], index: 0, kind: input, shape index: {}]
  %s1 = inlined_call_operand.vmem [shape: f32[3], index: 1, kind: input, shape index: {}]
  %s2 = inlined_call_operand.hbm [shape: f32[2,4,2,128], index: 2, kind: input, shape index: {}]
  %s3 = inlined_call_operand.hbm [shape: f32[2,3,2,128], index: 3, kind: output, shape index: {}]
  %s4 = sld [smem:[#allocation0]]
  $region57: #{tpu_custom_call.1} parent=0
    _
  %s6 = ssub.s32 1, %s4
  %s7 = scalar_select 0, %s6, %s4
  $region1: #{tpu_custom_call.1} parent=0
    #allocation2 [shape = 'u8[2048]{0}', space=smem, size = 0x800, scoped, tag = 'input window, operand 0, single buffered']
    #allocation3 [shape = 's32[2]{0}', space=sflag, size = 0x8, scoped, tag = 'scoped memory for tpu_custom_call.1']
    #allocation4 [shape = 's32[2]{0}', space=sflag, size = 0x8, scoped, tag = 'scoped memory for tpu_custom_call.1']
    #allocation5 [shape = 's32[2]{0}', space=sflag, size = 0x8, scoped, tag = 'scoped memory for tpu_custom_call.1']
    #allocation6 [shape = 's32[2]{0}', space=sflag, size = 0x8, scoped, tag = 'scoped memory for tpu_custom_call.1']
    #allocation7 [shape = 'u8[512]{0}', space=smem, size = 0x200, scoped, tag = 'input window, operand 1, single buffered']
    #allocation8 [shape = 'u8[8192]{0}', space=vmem, size = 0x2000, scoped, tag = 'input window, operand 2']
    #allocation9 [shape = 'u8[6144]{0}', space=vmem, size = 0x1800, scoped, tag = 'output window, operand 0']
    %8 = vsyncpa [#allocation5], 0
    %9 = vsyncpa [#allocation6], 0
    %10 = vsyncpa [#allocation3], 0
    %s11 = scalar_lea.sflag [#allocation3], 1
    %12 = vsyncpa %s11, 0
    %13 = vsyncpa [#allocation4], 0
    %s14 = scalar_lea.sflag [#allocation4], 1
    %15 = vsyncpa %s14, 0
    loop: start=0, step=1, limit=4
    $region2: #{tpu_custom_call.1} parent=1 // loop_pre_header
      _
    $region3: #{tpu_custom_call.1} parent=1 // loop_header
      %s17 = sphi 0, %s21
      %p18 = scmp.ge.s32.totalorder %s17, 4
      %s24 = sphi 0, %s36
      %s25 = sphi 0, %s32
      %s26 = sphi 0, %s24
      %s27 = sphi 0, %s25
      %s28 = sphi 0, %s26
      %s29 = sphi 0, %s27
      %s37 = sphi 0, %s37
      %s39 = sphi 0, %s37
      %s40 = sphi 0, %s39
      %s54 = sphi 0, %s40
      %s58 = sphi 0, %s58
      %s60 = sphi 0, %s58
      %s61 = sphi 0, %s60
      %s75 = sphi 0, %s61
      %s83 = sphi 0, %s85
      %s86 = sphi 0, %s83
      %s87 = sphi 0, %s86
      %s103 = sphi 0, %s87
      %s111 = sphi 0, %s113
      %s114 = sphi 0, %s111
      %s115 = sphi 0, %s114
      %s131 = sphi 0, %s115
    $region4: #{tpu_custom_call.1} parent=1 // loop_header_branch
      %20 = sbr.rel (%p18) target = $region8
    $region5: #{tpu_custom_call.1} parent=1 // loop_body
      %s22 = ssub.s32 %s17, 1
      %s23 = ssub.s32 %s17, 2
      %s30 = sadd.s32 1, %s25
      %p31 = scmp.ge.s32.totalorder %s30, 1
      %s32 = scalar_select %p31, 0, %s30
      %s33 = sadd.s32 1, %s24
      %s34 = scalar_select %p31, %s33, %s24
      %p35 = scmp.ge.s32.totalorder %s34, 2
      %s36 = scalar_select %p35, 0, %s34
      %s38 = sadd.s32 %s37, 1
      %p41 = scmp.eq.s32.totalorder %s17, 1
      %p42 = scmp.ne.s32.totalorder %s37, %s39
      %p43 = scmp.eq.s32.totalorder %s17, 0
      %p44 = por %p42, %p43
      %p45 = scmp.ne.s32.totalorder %s37, %s39
      %p46 = scmp.eq.s32.totalorder %s22, 1
      %p47 = por %p45, %p46
      %p48 = scmp.ne.s32.totalorder %s39, %s40
      %p49 = scmp.eq.s32.totalorder %s22, 0
      %p50 = por %p48, %p49
      %p51 = scmp.ne.s32.totalorder %s39, %s40
      %p52 = scmp.eq.s32.totalorder %s23, 1
      %p53 = por %p51, %p52
      %p55 = scmp.ne.s32.totalorder %s40, %s54
      %p56 = scmp.eq.s32.totalorder %s23, 0
      %p57 = por %p55, %p56
      %s59 = sadd.s32 %s58, 1
      %p62 = scmp.eq.s32.totalorder %s17, 1
      %p63 = scmp.ne.s32.totalorder %s58, %s60
      %p64 = scmp.eq.s32.totalorder %s17, 0
      %p65 = por %p63, %p64
      %p66 = scmp.ne.s32.totalorder %s58, %s60
      %p67 = scmp.eq.s32.totalorder %s22, 1
      %p68 = por %p66, %p67
      %p69 = scmp.ne.s32.totalorder %s60, %s61
      %p70 = scmp.eq.s32.totalorder %s22, 0
      %p71 = por %p69, %p70
      %p72 = scmp.ne.s32.totalorder %s60, %s61
      %p73 = scmp.eq.s32.totalorder %s23, 1
      %p74 = por %p72, %p73
      %p76 = scmp.ne.s32.totalorder %s61, %s75
      %p77 = scmp.eq.s32.totalorder %s23, 0
      %p78 = por %p76, %p77
      %s79 = ssub.s32 %s24, %s36
      %s80 = ssub.s32 %s25, %s32
      %s81 = sor.u32 %s79, %s80
      %p82 = scmp.eq.s32.totalorder %s81, 0
      %s84 = sadd.s32 %s83, 1
      %s85 = scalar_select %p82, %s83, %s84
      %p88 = pneg %p82
      %p89 = scmp.eq.s32.totalorder %s17, 1
      %p90 = por %p88, %p89
      %p91 = scmp.ne.s32.totalorder %s83, %s86
      %p92 = scmp.eq.s32.totalorder %s17, 0
      %p93 = por %p91, %p92
      %p94 = scmp.ne.s32.totalorder %s83, %s86
      %p95 = scmp.eq.s32.totalorder %s22, 1
      %p96 = por %p94, %p95
      %p97 = scmp.ne.s32.totalorder %s86, %s87
      %p98 = scmp.eq.s32.totalorder %s22, 0
      %p99 = por %p97, %p98
      %p100 = scmp.ne.s32.totalorder %s86, %s87
      %p101 = scmp.eq.s32.totalorder %s23, 1
      %p102 = por %p100, %p101
      %p104 = scmp.ne.s32.totalorder %s87, %s103
      %p105 = scmp.eq.s32.totalorder %s23, 0
      %p106 = por %p104, %p105
      %s107 = ssub.s32 %s24, %s36
      %s108 = ssub.s32 %s25, %s32
      %s109 = sor.u32 %s107, %s108
      %p110 = scmp.eq.s32.totalorder %s109, 0
      %s112 = sadd.s32 %s111, 1
      %s113 = scalar_select %p110, %s111, %s112
      %p116 = pneg %p110
      %p117 = scmp.eq.s32.totalorder %s17, 1
      %p118 = por %p116, %p117
      %p119 = scmp.ne.s32.totalorder %s111, %s114
      %p120 = scmp.eq.s32.totalorder %s17, 0
      %p121 = por %p119, %p120
      %p122 = scmp.ne.s32.totalorder %s111, %s114
      %p123 = scmp.eq.s32.totalorder %s22, 1
      %p124 = por %p122, %p123
      %p125 = scmp.ne.s32.totalorder %s114, %s115
      %p126 = scmp.eq.s32.totalorder %s22, 0
      %p127 = por %p125, %p126
      %p128 = scmp.ne.s32.totalorder %s114, %s115
      %p129 = scmp.eq.s32.totalorder %s23, 1
      %p130 = por %p128, %p129
      %p132 = scmp.ne.s32.totalorder %s115, %s131
      %p133 = scmp.eq.s32.totalorder %s23, 0
      %p134 = por %p132, %p133
      %p135 = scmp.le.s32.totalorder 1, %s17
      %p136 = scmp.lt.s32.totalorder %s17, 3
      %p137 = pnand %p135, %p136
      %p138 = pneg %p137
      // Predicated region
      $region9: #{tpu_custom_call.1} parent=5 // pred_check
        _
      $region10: #{tpu_custom_call.1} parent=5 // pred_check_branch
        %140 = sbr.rel (%p137) target = $region12
      $region11: #{tpu_custom_call.1} parent=5 // pred_region
        %s141 = ssub.s32 %s17, 1
        // Predicated region
        $region13: #{tpu_custom_call.1} parent=11 // pred_check
          %p142 = pneg %p50
        $region14: #{tpu_custom_call.1} parent=11 // pred_check_branch
          %144 = sbr.rel (%p142) target = $region16
        $region15: #{tpu_custom_call.1} parent=11 // pred_region
          %s146 = ssub.s32 64, 64
          %147 = vsyncadd [#allocation5], %s146
          %150 = dma.hbm_to_smem %s0, 64, [#allocation2], [#allocation5]
        $region16: #{tpu_custom_call.1} parent=11 // pred_fallthru
          _
        // Predicated region
        $region17: #{tpu_custom_call.1} parent=11 // pred_check
          %p151 = pneg %p71
        $region18: #{tpu_custom_call.1} parent=11 // pred_check_branch
          %153 = sbr.rel (%p151) target = $region20
        $region19: #{tpu_custom_call.1} parent=11 // pred_region
          %s155 = ssub.s32 16, 16
          %156 = vsyncadd [#allocation6], %s155
          %s158 = sshll.u32 %s1, 4
          %s159 = int_to_ptr.vmem [resolvable:$true] %s158
          %161 = dma.vmem_to_smem %s159, 16, [#allocation7], [#allocation6]
        $region20: #{tpu_custom_call.1} parent=11 // pred_fallthru
          _
      $region12: #{tpu_custom_call.1} parent=5 // pred_fallthru
        _
      %p162 = scmp.lt.s32.totalorder %s17, 2
      // Predicated region
      $region21: #{tpu_custom_call.1} parent=5 // pred_check
        %p163 = pneg %p162
      $region22: #{tpu_custom_call.1} parent=5 // pred_check_branch
        %165 = sbr.rel (%p163) target = $region24
      $region23: #{tpu_custom_call.1} parent=5 // pred_region
        // Predicated region
        $region25: #{tpu_custom_call.1} parent=23 // pred_check
          %p166 = pneg %p93
        $region26: #{tpu_custom_call.1} parent=23 // pred_check_branch
          %168 = sbr.rel (%p166) target = $region28
        $region27: #{tpu_custom_call.1} parent=23 // pred_region
          %s169 = sand.u32 %s83, 1
          %s170 = scalar_lea.sflag [#allocation3], %s169
          %s171 = sand.u32 %s83, 1
          %s172 = smul.addr %s171, 8
          %s173 = scalar_lea.vmem [#allocation8], %s172
          %s175 = ssub.s32 128, 128
          %176 = vsyncadd %s170, %s175
          %s177 = smul.addr %s24, 4
          %s178 = sadd.s32 %s25, %s177
          %s179 = smul.addr %s178, 32
          %s180 = scalar_lea.hbm %s2, %s179
          %s181 = sshll.u32 %s173, 4
          %s182 = int_to_ptr.vmem [resolvable:$true] %s181
          %187 = dma.hbm_to_vmem [thread:$0]  %s180, 128, %s182, %s170, 32, 32, 2
        $region28: #{tpu_custom_call.1} parent=23 // pred_fallthru
          _
      $region24: #{tpu_custom_call.1} parent=5 // pred_fallthru
        _
      %p188 = scmp.le.s32.totalorder 1, %s17
      %p189 = scmp.lt.s32.totalorder %s17, 3
      %p190 = pnand %p188, %p189
      %p191 = pneg %p190
      // Predicated region
      $region29: #{tpu_custom_call.1} parent=5 // pred_check
        _
      $region30: #{tpu_custom_call.1} parent=5 // pred_check_branch
        %193 = sbr.rel (%p190) target = $region32
      $region31: #{tpu_custom_call.1} parent=5 // pred_region
        %s194 = ssub.s32 %s17, 1
        // Predicated region
        $region33: #{tpu_custom_call.1} parent=31 // pred_check
          %p195 = pneg %p50
        $region34: #{tpu_custom_call.1} parent=31 // pred_check_branch
          %197 = sbr.rel (%p195) target = $region36
        $region35: #{tpu_custom_call.1} parent=31 // pred_region
          %198 = dma.done [#allocation5], 64
        $region36: #{tpu_custom_call.1} parent=31 // pred_fallthru
          _
        // Predicated region
        $region37: #{tpu_custom_call.1} parent=31 // pred_check
          %p199 = pneg %p71
        $region38: #{tpu_custom_call.1} parent=31 // pred_check_branch
          %201 = sbr.rel (%p199) target = $region40
        $region39: #{tpu_custom_call.1} parent=31 // pred_region
          %202 = dma.done [#allocation6], 16
        $region40: #{tpu_custom_call.1} parent=31 // pred_fallthru
          _
        %s203 = sand.u32 %s86, 1
        %s204 = scalar_lea.sflag [#allocation3], %s203
        %s205 = sand.u32 %s86, 1
        %s206 = smul.addr %s205, 8
        %s207 = scalar_lea.vmem [#allocation8], %s206
        // Predicated region
        $region41: #{tpu_custom_call.1} parent=31 // pred_check
          %p208 = pneg %p99
        $region42: #{tpu_custom_call.1} parent=31 // pred_check_branch
          %210 = sbr.rel (%p208) target = $region44
        $region43: #{tpu_custom_call.1} parent=31 // pred_region
          %211 = dma.done %s204, 128
        $region44: #{tpu_custom_call.1} parent=31 // pred_fallthru
          _
        %212 = sfence
        %p213 = pneg %p50
        %p214 = pneg %p47
        %p215 = pneg %p71
        %p216 = pneg %p68
        %s217 = sand.u32 %s86, 1
        %s218 = scalar_lea.sflag [#allocation3], %s217
        %s219 = sand.u32 %s86, 1
        %s220 = smul.addr %s219, 8
        %s221 = scalar_lea.vmem [#allocation8], %s220
        %p222 = pneg %p99
        %p223 = pneg %p96
        %p224 = pneg %p127
        %p225 = pneg %p124
        %s226 = sand.u32 %s114, 1
        %s227 = scalar_lea.sflag [#allocation4], %s226
        %s228 = sand.u32 %s114, 1
        %s229 = smul.addr %s228, 6
        %s230 = scalar_lea.vmem [#allocation9], %s229
        %s231 = sld [smem:[#allocation7]]
        %s232 = sld [smem:[#allocation2]]
        %v233 = vld [vmem:[%s207] sm:$0x3]
        %v234 = vstv %s232
        %v235 = vmul.f32 %v234, %v233
        %v236 = vstv %s231
        %v237 = vadd.f32 %v236, %v235
        %s238 = sld [smem:[#allocation2 + $0x1]]
        %s239 = scalar_lea.vmem %s207, 2 [#allocation8]
        %v240 = vld [vmem:[%s239] sm:$0x3]
        %v241 = vstv %s238
        %v242 = vmul.f32 %v241, %v240
        %v243 = vadd.f32 %v237, %v242
        %s244 = sld [smem:[#allocation2 + $0x2]]
        %s245 = scalar_lea.vmem %s207, 4 [#allocation8]
        %v246 = vld [vmem:[%s245] sm:$0x3]
        %v247 = vstv %s244
        %v248 = vmul.f32 %v247, %v246
        %v249 = vadd.f32 %v243, %v248
        %s250 = sld [smem:[#allocation2 + $0x3]]
        %s251 = scalar_lea.vmem %s207, 6 [#allocation8]
        %v252 = vld [vmem:[%s251] sm:$0x3]
        %v253 = vstv %s250
        %v254 = vmul.f32 %v253, %v252
        %v255 = vadd.f32 %v249, %v254
        %256 = vst [vmem:[%s230] sm:$0x3] %v255
        %s257 = sld [smem:[#allocation7 + $0x1]]
        %s258 = sld [smem:[#allocation2 + $0x80]]
        %v259 = vld [vmem:[%s207] sm:$0x3]
        %v260 = vstv %s258
        %v261 = vmul.f32 %v260, %v259
        %v262 = vstv %s257
        %v263 = vadd.f32 %v262, %v261
        %s264 = sld [smem:[#allocation2 + $0x81]]
        %v265 = vld [vmem:[%s239] sm:$0x3]
        %v266 = vstv %s264
        %v267 = vmul.f32 %v266, %v265
        %v268 = vadd.f32 %v263, %v267
        %s269 = sld [smem:[#allocation2 + $0x82]]
        %v270 = vld [vmem:[%s245] sm:$0x3]
        %v271 = vstv %s269
        %v272 = vmul.f32 %v271, %v270
        %v273 = vadd.f32 %v268, %v272
        %s274 = sld [smem:[#allocation2 + $0x83]]
        %v275 = vld [vmem:[%s251] sm:$0x3]
        %v276 = vstv %s274
        %v277 = vmul.f32 %v276, %v275
        %v278 = vadd.f32 %v273, %v277
        %s279 = scalar_lea.vmem %s230, 2 [#allocation9]
        %280 = vst [vmem:[%s279] sm:$0x3] %v278
        %s281 = sld [smem:[#allocation7 + $0x2]]
        %s282 = sld [smem:[#allocation2 + $0x100]]
        %v283 = vld [vmem:[%s207] sm:$0x3]
        %v284 = vstv %s282
        %v285 = vmul.f32 %v284, %v283
        %v286 = vstv %s281
        %v287 = vadd.f32 %v286, %v285
        %s288 = sld [smem:[#allocation2 + $0x101]]
        %v289 = vld [vmem:[%s239] sm:$0x3]
        %v290 = vstv %s288
        %v291 = vmul.f32 %v290, %v289
        %v292 = vadd.f32 %v287, %v291
        %s293 = sld [smem:[#allocation2 + $0x102]]
        %v294 = vld [vmem:[%s245] sm:$0x3]
        %v295 = vstv %s293
        %v296 = vmul.f32 %v295, %v294
        %v297 = vadd.f32 %v292, %v296
        %s298 = sld [smem:[#allocation2 + $0x103]]
        %v299 = vld [vmem:[%s251] sm:$0x3]
        %v300 = vstv %s298
        %v301 = vmul.f32 %v300, %v299
        %v302 = vadd.f32 %v297, %v301
        %s303 = scalar_lea.vmem %s230, 4 [#allocation9]
        %304 = vst [vmem:[%s303] sm:$0x3] %v302
        %s305 = sand.u32 %s114, 1
        %s306 = scalar_lea.sflag [#allocation4], %s305
        %s307 = sand.u32 %s114, 1
        %s308 = smul.addr %s307, 6
        %s309 = scalar_lea.vmem [#allocation9], %s308
        // Predicated region
        $region45: #{tpu_custom_call.1} parent=31 // pred_check
          %p310 = pneg %p124
        $region46: #{tpu_custom_call.1} parent=31 // pred_check_branch
          %312 = sbr.rel (%p310) target = $region48
        $region47: #{tpu_custom_call.1} parent=31 // pred_region
          %s314 = ssub.s32 96, 96
          %315 = vsyncadd %s306, %s314
          %s316 = smul.addr %s26, 3
          %s317 = sadd.s32 %s27, %s316
          %s318 = smul.addr %s317, 32
          %s319 = scalar_lea.hbm %s3, %s318
          %s320 = sshll.u32 %s309, 4
          %s321 = int_to_ptr.vmem [resolvable:$true] %s320
          %326 = dma.vmem_to_hbm [thread:$0]  %s321, 96, %s319, %s306, 32, 32, 2
        $region48: #{tpu_custom_call.1} parent=31 // pred_fallthru
          _
      $region32: #{tpu_custom_call.1} parent=5 // pred_fallthru
        _
      %p327 = scmp.le.s32.totalorder 2, %s17
      // Predicated region
      $region49: #{tpu_custom_call.1} parent=5 // pred_check
        %p328 = pneg %p327
      $region50: #{tpu_custom_call.1} parent=5 // pred_check_branch
        %330 = sbr.rel (%p328) target = $region52
      $region51: #{tpu_custom_call.1} parent=5 // pred_region
        %s331 = ssub.s32 %s17, 2
        // Predicated region
        $region53: #{tpu_custom_call.1} parent=51 // pred_check
          %p332 = pneg %p130
        $region54: #{tpu_custom_call.1} parent=51 // pred_check_branch
          %334 = sbr.rel (%p332) target = $region56
        $region55: #{tpu_custom_call.1} parent=51 // pred_region
          %s335 = sand.u32 %s115, 1
          %s336 = scalar_lea.sflag [#allocation4], %s335
          %s337 = sand.u32 %s115, 1
          %s338 = smul.addr %s337, 6
          %s339 = scalar_lea.vmem [#allocation9], %s338
          %340 = dma.done %s336, 96
        $region56: #{tpu_custom_call.1} parent=51 // pred_fallthru
          _
      $region52: #{tpu_custom_call.1} parent=5 // pred_fallthru
        _
    $region6: #{tpu_custom_call.1} parent=1 // loop_footer
      %s21 = sadd.s32 1, %s17
    $region7: #{tpu_custom_call.1} parent=1 // loop_footer_branch
      %16 = sbr.rel target = $region3
    $region8: #{tpu_custom_call.1} parent=1 // loop_exit
      _
    %341 = vsyncpa [#allocation3], 1
    %s342 = scalar_lea.sflag [#allocation3], 1
    %343 = vsyncpa %s342, 1
    %344 = vsyncpa [#allocation4], 1
    %s345 = scalar_lea.sflag [#allocation4], 1
    %346 = vsyncpa %s345, 1
    %347 = vsyncpa [#allocation5], 1
    %s348 = scalar_lea.sflag [#allocation5], 1
    %349 = vsyncpa %s348, 1
    %350 = vsyncpa [#allocation6], 1
    %s351 = scalar_lea.sflag [#allocation6], 1
    %352 = vsyncpa %s351, 1

</llo_original>
